<compile_context>
chip_gen: v7x
topology: tpu7x:2x2x1
jax: 0.10.0
libtpu: 0.0.40
codegen_flags: <defaults>
</compile_context>

<pallas_src>
import functools

import jax
import jax.numpy as jnp
from jax import lax
from jax.experimental import pallas as pl
from jax.experimental.pallas import tpu as pltpu


def _round_up(a: int, b: int) -> int:
    return ((a + b - 1) // b) * b


def rank_loss_kernel(x_ref, idx0_ref, idx1_ref, out_ref, diff_acc):
    """Grid: (num_p_tiles, num_n_tiles); N axis is the reduction (last, "arbitrary").

    x_ref    : (1, n_tile)  f32   scores tile (lane-dense)
    idx0_ref : (p_tile, 1)  i32   "winner" indices for this pair tile
    idx1_ref : (p_tile, 1)  i32   "loser"  indices for this pair tile
    out_ref  : (p_tile, 1)  f32   per-pair exp(diff) (padded rows sliced off in wrapper)
    diff_acc : (p_tile, 1)  f32   VMEM scratch accumulating x[i1] - x[i0] over N tiles
    """
    p_tile = idx0_ref.shape[0]
    n_tile = x_ref.shape[1]

    # All grid introspection happens at the top level of the kernel body
    # (never inside a pl.when branch body).
    n_id = pl.program_id(1)
    n_last = pl.num_programs(1) - 1

    @pl.when(n_id == 0)
    def _init():
        diff_acc[...] = jnp.zeros_like(diff_acc)

    x = x_ref[...]                                        # (1, n_tile) f32
    i0 = idx0_ref[...]                                    # (p_tile, 1) i32
    i1 = idx1_ref[...]                                    # (p_tile, 1) i32

    # Global column (item) index of every lane in this N tile.
    col = lax.broadcasted_iota(jnp.int32, (p_tile, n_tile), 1) + n_id * n_tile
    xb = jnp.broadcast_to(x, (p_tile, n_tile))            # sublane broadcast

    # Fused signed gather: +x where col==idx1, -x where col==idx0, 0 elsewhere.
    # Single cross-lane reduce per (p_tile, n_tile) block.
    contrib = jnp.where(col == i1, xb, 0.0) - jnp.where(col == i0, xb, 0.0)
    diff_acc[...] += jnp.sum(contrib, axis=1, keepdims=True)

    @pl.when(n_id == n_last)
    def _finalize():
        out_ref[...] = jnp.exp(diff_acc[...])


def rank_loss_forward(input_scores, target, *, p_tile=128, n_tile=512):
    """input_scores: (N,) float scores; target: (P, 2) int pair indices -> scalar loss."""
    x = jnp.asarray(input_scores, jnp.float32).reshape(-1)
    tgt = jnp.asarray(target, jnp.int32)
    N = x.shape[0]
    P = tgt.shape[0]

    # Tile sizes: lane dim multiple of 128, sublane dim multiple of 8 (or full dim).
    n_tile = min(n_tile, _round_up(N, 128))
    p_tile = min(p_tile, _round_up(P, 8))
    n_pad = _round_up(N, n_tile)
    p_pad = _round_up(P, p_tile)

    x_pad = jnp.pad(x, (0, n_pad - N)).reshape(1, n_pad)               # lane-dense scores
    idx0 = jnp.pad(tgt[:, 0], (0, p_pad - P)).reshape(p_pad, 1)        # (P,1) winner idx
    idx1 = jnp.pad(tgt[:, 1], (0, p_pad - P)).reshape(p_pad, 1)        # (P,1) loser  idx

    num_p = p_pad // p_tile
    num_n = n_pad // n_tile

    per_pair_exp = pl.pallas_call(
        rank_loss_kernel,
        out_shape=jax.ShapeDtypeStruct((p_pad, 1), jnp.float32),
        grid_spec=pltpu.PrefetchScalarGridSpec(
            num_scalar_prefetch=0,
            grid=(num_p, num_n),
            in_specs=[
                pl.BlockSpec((1, n_tile), lambda p, n: (0, n)),
                pl.BlockSpec((p_tile, 1), lambda p, n: (p, 0)),
                pl.BlockSpec((p_tile, 1), lambda p, n: (p, 0)),
            ],
            out_specs=pl.BlockSpec((p_tile, 1), lambda p, n: (p, 0)),
            scratch_shapes=[pltpu.VMEM((p_tile, 1), jnp.float32)],
        ),
        compiler_params=pltpu.CompilerParams(
            dimension_semantics=("parallel", "arbitrary"),
        ),
    )(x_pad, idx0, idx1)

    # Tiny O(P) epilogue: log(1 + sum_p exp(diff_p)); padded rows are sliced off
    # (P is a static Python int, so this is a static slice).
    return jnp.log1p(jnp.sum(per_pair_exp[:P, 0]))


if __name__ == "__main__":
    key = jax.random.PRNGKey(0)
    k1, k2, k3, k4 = jax.random.split(key, 4)

    # Small case (single tile): N=16 scores, P=8 ranking pairs.
    N, P = 16, 8
    x = jax.random.normal(k1, (N,), dtype=jnp.float32)
    tgt = jax.random.randint(k2, (P, 2), 0, N, dtype=jnp.int32)

    loss = jax.block_until_ready(rank_loss_forward(x, tgt))
    ref = jnp.log1p(jnp.sum(jnp.exp(x[tgt[:, 1]] - x[tgt[:, 0]])))
    assert jnp.allclose(loss, ref, rtol=1e-4, atol=1e-4), (loss, ref)

    # Multi-tile case: exercises the (P, N) grid, padding and pair-row slicing.
    N2, P2 = 1200, 200
    x2 = 0.1 * jax.random.normal(k3, (N2,), dtype=jnp.float32)
    tgt2 = jax.random.randint(k4, (P2, 2), 0, N2, dtype=jnp.int32)

    loss2 = jax.block_until_ready(rank_loss_forward(x2, tgt2))
    ref2 = jnp.log1p(jnp.sum(jnp.exp(x2[tgt2[:, 1]] - x2[tgt2[:, 0]])))
    assert jnp.allclose(loss2, ref2, rtol=1e-4, atol=1e-4), (loss2, ref2)

    print("KERNEL_OK")
</pallas_src>

<mosaic_0001>
module attributes {stable_mosaic.version = 11 : i64} {
  func.func @rank_loss_kernel(%arg0: i32, %arg1: i32, %arg2: memref<1x128xf32, #tpu.memory_space<vmem>>, %arg3: memref<8x1xi32, #tpu.memory_space<vmem>>, %arg4: memref<8x1xi32, #tpu.memory_space<vmem>>, %arg5: memref<8x1xf32, #tpu.memory_space<vmem>>, %arg6: memref<8x1xf32, #tpu.memory_space<vmem>>) attributes {dimension_semantics = [#tpu.dimension_semantics<parallel>, #tpu.dimension_semantics<arbitrary>], iteration_bounds = array<i64: 1, 1>, scalar_prefetch = 0 : i64, scratch_operands = 1 : i64, tpu.core_type = #tpu.core_type<tc>, window_params = [{transform_indices = @transform_0, window_bounds = array<i64: 1, 128>}, {transform_indices = @transform_1, window_bounds = array<i64: 8, 1>}, {transform_indices = @transform_2, window_bounds = array<i64: 8, 1>}, {transform_indices = @transform_3, window_bounds = array<i64: 8, 1>}]} {
    %c0_i32 = arith.constant 0 : i32
    %0 = arith.cmpi eq, %arg1, %c0_i32 : i32
    %1 = arith.extui %0 : i1 to i32
    %c0_i32_0 = arith.constant 0 : i32
    %2 = arith.cmpi ne, %1, %c0_i32_0 : i32
    scf.if %2 {
      %cst_14 = arith.constant 0.000000e+00 : f32
      %29 = vector.broadcast %cst_14 : f32 to vector<8x1xf32>
      %c0_15 = arith.constant 0 : index
      %c0_16 = arith.constant 0 : index
      %30 = vector.load %arg6[%c0_15, %c0_16] : memref<8x1xf32, #tpu.memory_space<vmem>>, vector<8x1xf32>
      tpu.vector_store %arg6[%c0_15, %c0_16], %29 {strides = array<i32>} : memref<8x1xf32, #tpu.memory_space<vmem>>, vector<8x1xf32>,
    } else {
    }
    %c0 = arith.constant 0 : index
    %c0_1 = arith.constant 0 : index
    %3 = vector.load %arg2[%c0, %c0_1] : memref<1x128xf32, #tpu.memory_space<vmem>>, vector<1x128xf32>
    %c0_2 = arith.constant 0 : index
    %c0_3 = arith.constant 0 : index
    %4 = vector.load %arg3[%c0_2, %c0_3] : memref<8x1xi32, #tpu.memory_space<vmem>>, vector<8x1xi32>
    %c0_4 = arith.constant 0 : index
    %c0_5 = arith.constant 0 : index
    %5 = vector.load %arg4[%c0_4, %c0_5] : memref<8x1xi32, #tpu.memory_space<vmem>>, vector<8x1xi32>
    %6 = tpu.iota {dimensions = array<i32: 1>} : vector<8x128xi32>
    %c128_i32 = arith.constant 128 : i32
    %7 = arith.muli %arg1, %c128_i32 : i32
    %8 = vector.broadcast %7 : i32 to vector<8x128xi32>
    %9 = arith.addi %6, %8 : vector<8x128xi32>
    %10 = vector.shape_cast %3 : vector<1x128xf32> to vector<1x128xf32>
    %11 = vector.broadcast %10 : vector<1x128xf32> to vector<8x128xf32>
    %12 = vector.broadcast %5 : vector<8x1xi32> to vector<8x128xi32>
    %13 = arith.cmpi eq, %9, %12 : vector<8x128xi32>
    %cst = arith.constant 0.000000e+00 : f32
    %14 = vector.broadcast %cst : f32 to vector<8x128xf32>
    %15 = arith.select %13, %11, %14 : vector<8x128xi1>, vector<8x128xf32>
    %16 = vector.broadcast %4 : vector<8x1xi32> to vector<8x128xi32>
    %17 = arith.cmpi eq, %9, %16 : vector<8x128xi32>
    %cst_6 = arith.constant 0.000000e+00 : f32
    %18 = vector.broadcast %cst_6 : f32 to vector<8x128xf32>
    %19 = arith.select %17, %11, %18 : vector<8x128xi1>, vector<8x128xf32>
    %20 = arith.subf %15, %19 : vector<8x128xf32>
    %c0_7 = arith.constant 0 : index
    %c0_8 = arith.constant 0 : index
    %21 = vector.load %arg6[%c0_7, %c0_8] : memref<8x1xf32, #tpu.memory_space<vmem>>, vector<8x1xf32>
    %cst_9 = arith.constant dense<0.000000e+00> : vector<8xf32>
    %22 = vector.multi_reduction <add>, %20, %cst_9 [1] : vector<8x128xf32> to vector<8xf32>
    %23 = vector.shape_cast %22 : vector<8xf32> to vector<8x1xf32>
    %24 = arith.addf %21, %23 : vector<8x1xf32>
    %c0_10 = arith.constant 0 : index
    %c0_11 = arith.constant 0 : index
    %25 = vector.load %arg6[%c0_10, %c0_11] : memref<8x1xf32, #tpu.memory_space<vmem>>, vector<8x1xf32>
    tpu.vector_store %arg6[%c0_10, %c0_11], %24 {strides = array<i32>} : memref<8x1xf32, #tpu.memory_space<vmem>>, vector<8x1xf32>,
    %c0_i32_12 = arith.constant 0 : i32
    %26 = arith.cmpi eq, %arg1, %c0_i32_12 : i32
    %27 = arith.extui %26 : i1 to i32
    %c0_i32_13 = arith.constant 0 : i32
    %28 = arith.cmpi ne, %27, %c0_i32_13 : i32
    scf.if %28 {
      %c0_14 = arith.constant 0 : index
      %c0_15 = arith.constant 0 : index
      %29 = vector.load %arg6[%c0_14, %c0_15] : memref<8x1xf32, #tpu.memory_space<vmem>>, vector<8x1xf32>
      %30 = math.exp %29 : vector<8x1xf32>
      %c0_16 = arith.constant 0 : index
      %c0_17 = arith.constant 0 : index
      %31 = vector.load %arg5[%c0_16, %c0_17] : memref<8x1xf32, #tpu.memory_space<vmem>>, vector<8x1xf32>
      tpu.vector_store %arg5[%c0_16, %c0_17], %30 {strides = array<i32>} : memref<8x1xf32, #tpu.memory_space<vmem>>, vector<8x1xf32>,
    } else {
    }
    return
  }
  func.func @transform_0(%arg0: i32, %arg1: i32) -> (i32, i32) {
    %c0_i32 = arith.constant 0 : i32
    %c0_i32_0 = arith.constant 0 : i32
    return %c0_i32, %arg1 : i32, i32
  }
  func.func @transform_1(%arg0: i32, %arg1: i32) -> (i32, i32) {
    %c0_i32 = arith.constant 0 : i32
    %c0_i32_0 = arith.constant 0 : i32
    return %arg0, %c0_i32 : i32, i32
  }
  func.func @transform_2(%arg0: i32, %arg1: i32) -> (i32, i32) {
    %c0_i32 = arith.constant 0 : i32
    %c0_i32_0 = arith.constant 0 : i32
    return %arg0, %c0_i32 : i32, i32
  }
  func.func @transform_3(%arg0: i32, %arg1: i32) -> (i32, i32) {
    %c0_i32 = arith.constant 0 : i32
    %c0_i32_0 = arith.constant 0 : i32
    return %arg0, %c0_i32 : i32, i32
  }
}

</mosaic_0001>

<llo_original>
// kernel: tpu_custom_call.1
$region0: #{tpu_custom_call.1}
  #allocation0 [shape = 'u32[]', space=smem, size = 0x4, offset = 0x4, fixed_abs, tag = 'smem constant byte address 0x4 - core index']
  #allocation1 [shape = 'u32[144,128]{1,0:T(1,128)}', space=vmem, size = 0x12000, scoped, tag = 'internal scratch']
  #allocation2 [shape = 'f32[8,1]{1,0:T(8,128)}', space=vmem, size = 0x1000, scoped, tag = 'scratch operand']
  %s0 = inlined_call_operand.vmem [shape: f32[1,128], index: 0, kind: input, shape index: {}]
  %s1 = inlined_call_operand.vmem [shape: s32[8,1], index: 1, kind: input, shape index: {}]
  %s2 = inlined_call_operand.vmem [shape: s32[8,1], index: 2, kind: input, shape index: {}]
  %s3 = inlined_call_operand.vmem [shape: f32[8,1], index: 3, kind: output, shape index: {}]
  %s4 = sld [smem:[#allocation0]]
  $region30: #{tpu_custom_call.1} parent=0
    _
  %s6 = ssub.s32 1, %s4
  %s7 = scalar_select 0, %s6, %s4
  // Predicated region
  $region2: #{tpu_custom_call.1} parent=0 // pred_check
    _
  $region3: #{tpu_custom_call.1} parent=0 // pred_check_branch
    %9 = sbr.rel (0) target = $region5
  $region4: #{tpu_custom_call.1} parent=0 // pred_region
    _
  $region5: #{tpu_custom_call.1} parent=0 // pred_fallthru
    _
  // Predicated region
  $region6: #{tpu_custom_call.1} parent=0 // pred_check
    _
  $region7: #{tpu_custom_call.1} parent=0 // pred_check_branch
    %11 = sbr.rel (0) target = $region9
  $region8: #{tpu_custom_call.1} parent=0 // pred_region
    _
  $region9: #{tpu_custom_call.1} parent=0 // pred_fallthru
    _
  // Predicated region
  $region10: #{tpu_custom_call.1} parent=0 // pred_check
    _
  $region11: #{tpu_custom_call.1} parent=0 // pred_check_branch
    %13 = sbr.rel (0) target = $region13
  $region12: #{tpu_custom_call.1} parent=0 // pred_region
    _
  $region13: #{tpu_custom_call.1} parent=0 // pred_fallthru
    _
  %p14 = scmp.eq.s32.totalorder 0, 0
  // Predicated region
  $region14: #{tpu_custom_call.1} parent=0 // pred_check
    %p15 = pneg %p14
  $region15: #{tpu_custom_call.1} parent=0 // pred_check_branch
    %17 = sbr.rel (%p15) target = $region17
  $region16: #{tpu_custom_call.1} parent=0 // pred_region
    %vm18 = vcmask 7168
    %19 = vst.msk [vmem:[#allocation2] sm:$0xff] %vm18, 0.0
  $region17: #{tpu_custom_call.1} parent=0 // pred_fallthru
    _
  %v20 = vld [vmem:[%s0] sm:$0x1]
  %v21 = vld [vmem:[%s1] sm:$0xff]
  %v22 = vld [vmem:[%s2] sm:$0xff]
  %v23 = vlaneseq
  %v24 = vand.u32 %v23, 127
  %s25 = smul.u32 0, 128
  %v26 = vstv %s25
  %v27 = vadd.s32 %v24, %v26
  %v29 = vlaneseq
  %v30 = vshrl.u32 %v29, 7
  %v31 = vsub.s32 0, %v30
  %v32 = vrot.slane %v20, %v31
  %34 = vset.pattern.permute.xlu0 0
  %35 = vperm.xlu0 %34, %v22
  %v36 = vpop.permute.xlu0 %35
  %vm37 = vcmp.eq.s32.totalorder %v27, %v36
  %v38 = vsel %vm37, %v32, 0.0
  %39 = vset.pattern.permute.xlu0 0
  %40 = vperm.xlu0 %39, %v21
  %v41 = vpop.permute.xlu0 %40
  %vm42 = vcmp.eq.s32.totalorder %v27, %v41
  %v43 = vsel %vm42, %v32, 0.0
  %v44 = vsub.f32 %v38, %v43
  %v45 = vld [vmem:[#allocation2] sm:$0xff]
  %46 = vadd.xlane.f32.xlu0 %v44
  %v47 = vpop.xlane.xlu0 %46
  %v48 = vadd.f32 %v45, %v47
  %vm49 = vcmask 7168
  %50 = vst.msk [vmem:[#allocation2] sm:$0xff] %vm49, %v48
  // Predicated region
  $region18: #{tpu_custom_call.1} parent=0 // pred_check
    %p51 = pneg %p14
  $region19: #{tpu_custom_call.1} parent=0 // pred_check_branch
    %53 = sbr.rel (%p51) target = $region21
  $region20: #{tpu_custom_call.1} parent=0 // pred_region
    %v54 = vld [vmem:[#allocation2] sm:$0xff]
    %v55 = vmul.f32 %v54, 1.442695
    %v56 = vpow.pop %v55
    %57 = vst.msk [vmem:[%s3] sm:$0xff] %vm49, %v56
  $region21: #{tpu_custom_call.1} parent=0 // pred_fallthru
    _
  // Predicated region
  $region22: #{tpu_custom_call.1} parent=0 // pred_check
    _
  $region23: #{tpu_custom_call.1} parent=0 // pred_check_branch
    %59 = sbr.rel (0) target = $region25
  $region24: #{tpu_custom_call.1} parent=0 // pred_region
    _
  $region25: #{tpu_custom_call.1} parent=0 // pred_fallthru
    _
  // Predicated region
  $region26: #{tpu_custom_call.1} parent=0 // pred_check
    _
  $region27: #{tpu_custom_call.1} parent=0 // pred_check_branch
    %61 = sbr.rel (0) target = $region29
  $region28: #{tpu_custom_call.1} parent=0 // pred_region
    _
  $region29: #{tpu_custom_call.1} parent=0 // pred_fallthru
    _

</llo_original>
